<compile_context>
chip_gen: v7x
topology: tpu7x:2x2x1
jax: 0.10.0
libtpu: 0.0.40
codegen_flags: <defaults>
</compile_context>

<pallas_src>
import jax
import jax.numpy as jnp
from jax.experimental import pallas as pl
from jax.experimental.pallas import tpu as pltpu


def film_kernel(r_ref, b_ref, feat_ref, out_ref):
    # r_ref/b_ref: (1, F, 1) f32   feat_ref/out_ref: (1, F, T_TILE)
    x = feat_ref[...]
    r = r_ref[...]                 # F on sublanes -> broadcast is a lane splat
    b = b_ref[...]
    out_ref[...] = (r * x.astype(jnp.float32) + b).astype(out_ref.dtype)


def _vmem_capacity_bytes():
    try:
        return int(pltpu.get_tpu_info().vmem_capacity_bytes)
    except Exception:
        return 64 * 2**20          # conservative (v7x-class) fallback


def _pick_t_tile(T, F, itemsize, stream_budget_bytes):
    """Lane-dense (128-multiple) T tile, byte-budget driven."""
    if T <= 128:
        return T                   # block == full dim (always legal)
    # Cap so feat+out double-buffered (4 * F * t_tile * itemsize) fits budget.
    max_tile = max(128, (stream_budget_bytes // (4 * F * itemsize)) // 128 * 128)
    # Target ~4 MiB per feature tile to amortize per-grid-step overhead.
    target = max(128, (4 * 2**20 // (F * itemsize)) // 128 * 128)
    t_full_128 = ((T + 127) // 128) * 128
    t_tile = min(max_tile, target, t_full_128)
    # Prefer a nearby exact divisor of T (avoids a ragged last block) as long
    # as it doesn't shrink the tile below half of the chosen size.
    if T % t_tile != 0:
        cand = t_tile
        while cand >= max(128, t_tile // 2):
            if T % cand == 0:
                return cand
            cand -= 128
    return t_tile


def film_forward(feature, condition, weight, bias):
    """feature: (B, F, T); condition: (B, Dc); weight: (2F, Dc); bias: (2F,)."""
    B, F, T = feature.shape
    Dc = condition.shape[1]
    assert weight.shape == (2 * F, Dc)
    assert bias.shape == (2 * F,)

    # Tiny FiLM linear hoisted to XLA (O(B*Dc*2F) FLOPs — noise next to the
    # O(B*F*T) streaming work).  Keep it in f32.
    film = (
        condition.astype(jnp.float32) @ weight.astype(jnp.float32).T
        + bias.astype(jnp.float32)
    )                                               # (B, 2F) f32
    r = film[:, :F].reshape(B, F, 1)                # (B, F, 1) scale
    b = film[:, F:].reshape(B, F, 1)                # (B, F, 1) shift

    itemsize = jnp.dtype(feature.dtype).itemsize

    # Generation-aware budgets.
    vmem_cap = _vmem_capacity_bytes()
    if vmem_cap <= 64 * 2**20:                      # v7x-class (64 MiB VMEM)
        stream_budget = 24 * 2**20
        limit_ceiling = 48 * 2**20
    else:                                           # v5e / v6e (128 MiB VMEM)
        stream_budget = 64 * 2**20
        limit_ceiling = 100 * 2**20

    t_tile = _pick_t_tile(T, F, itemsize, stream_budget)
    grid = (B, pl.cdiv(T, t_tile))

    # feat + out tiles double-buffered, plus the (tiny) double-buffered r/b.
    vmem_est = 4 * F * t_tile * itemsize + 4 * F * 4
    vmem_limit = None
    if int(1.25 * vmem_est) > 16 * 2**20:           # 16 MiB = smallest default (v5e)
        vmem_limit = min(max(int(1.5 * vmem_est), 32 * 2**20), limit_ceiling)

    cost = pl.CostEstimate(
        flops=2 * B * F * T,
        transcendentals=0,
        bytes_accessed=2 * B * F * T * itemsize + 2 * B * F * 4,
    )

    grid_spec = pltpu.PrefetchScalarGridSpec(
        num_scalar_prefetch=0,
        grid=grid,
        in_specs=[
            # r / b: one (1, F, 1) column per batch, constant across T tiles
            # (Pallas reuses the VMEM copy instead of re-DMAing).
            pl.BlockSpec((1, F, 1), lambda bi, ti: (bi, 0, 0)),
            pl.BlockSpec((1, F, 1), lambda bi, ti: (bi, 0, 0)),
            # feature: lane-dense (1, F, T_TILE) streaming tiles.
            pl.BlockSpec((1, F, t_tile), lambda bi, ti: (bi, 0, ti)),
        ],
        out_specs=pl.BlockSpec((1, F, t_tile), lambda bi, ti: (bi, 0, ti)),
    )

    return pl.pallas_call(
        film_kernel,
        out_shape=jax.ShapeDtypeStruct(feature.shape, feature.dtype),
        grid_spec=grid_spec,
        compiler_params=pltpu.CompilerParams(
            # No cross-iteration state -> both axes parallel (megacore / v7x
            # dual-TC sharding even when B is small).
            dimension_semantics=("parallel", "parallel"),
            vmem_limit_bytes=vmem_limit,
        ),
        cost_estimate=cost,
    )(r, b, feature)


def film_reference(feature, condition, weight, bias):
    film = condition @ weight.T + bias                    # (B, 2F)
    feat_len = feature.shape[1]
    r = film[:, :feat_len][:, :, None]
    b = film[:, feat_len:][:, :, None]
    return r * feature + b


if __name__ == "__main__":
    # Small shapes consistent with the module's forward (scaled-down
    # condition_len / feature_len; T chosen so the time axis actually tiles).
    B, cond_len, feat_len, T = 2, 256, 64, 2048

    key = jax.random.PRNGKey(0)
    k_feat, k_cond, k_w, k_b = jax.random.split(key, 4)

    feature = jax.random.normal(k_feat, (B, feat_len, T), dtype=jnp.float32)
    condition = jax.random.normal(k_cond, (B, cond_len), dtype=jnp.float32)

    # Deterministic parameter init (nn.Linear: weight (2F, Dc), bias (2F,)).
    bound = 1.0 / (cond_len ** 0.5)
    weight = jax.random.uniform(
        k_w, (2 * feat_len, cond_len), minval=-bound, maxval=bound,
        dtype=jnp.float32)
    bias = jax.random.uniform(
        k_b, (2 * feat_len,), minval=-bound, maxval=bound, dtype=jnp.float32)

    out = film_forward(feature, condition, weight, bias)
    out = jax.block_until_ready(out)

    ref = film_reference(feature, condition, weight, bias)
    assert out.shape == (B, feat_len, T)
    assert jnp.allclose(out, ref, atol=1e-4, rtol=1e-4), (
        float(jnp.max(jnp.abs(out - ref))))

    print("KERNEL_OK")
</pallas_src>

<mosaic_0001>
module attributes {stable_mosaic.version = 11 : i64} {
  func.func @film_kernel(%arg0: i32, %arg1: i32, %arg2: memref<1x64x1xf32, #tpu.memory_space<vmem>>, %arg3: memref<1x64x1xf32, #tpu.memory_space<vmem>>, %arg4: memref<1x64x2048xf32, #tpu.memory_space<vmem>>, %arg5: memref<1x64x2048xf32, #tpu.memory_space<vmem>>) attributes {dimension_semantics = [#tpu.dimension_semantics<parallel>, #tpu.dimension_semantics<parallel>], iteration_bounds = array<i64: 2, 1>, scalar_prefetch = 0 : i64, scratch_operands = 0 : i64, tpu.core_type = #tpu.core_type<tc>, window_params = [{transform_indices = @transform_0, window_bounds = array<i64: 1, 64, 1>}, {transform_indices = @transform_1, window_bounds = array<i64: 1, 64, 1>}, {transform_indices = @transform_2, window_bounds = array<i64: 1, 64, 2048>}, {transform_indices = @transform_3, window_bounds = array<i64: 1, 64, 2048>}]} {
    %c0 = arith.constant 0 : index
    %c0_0 = arith.constant 0 : index
    %c0_1 = arith.constant 0 : index
    %0 = vector.load %arg4[%c0, %c0_0, %c0_1] : memref<1x64x2048xf32, #tpu.memory_space<vmem>>, vector<1x64x2048xf32>
    %c0_2 = arith.constant 0 : index
    %c0_3 = arith.constant 0 : index
    %c0_4 = arith.constant 0 : index
    %1 = vector.load %arg2[%c0_2, %c0_3, %c0_4] : memref<1x64x1xf32, #tpu.memory_space<vmem>>, vector<1x64x1xf32>
    %c0_5 = arith.constant 0 : index
    %c0_6 = arith.constant 0 : index
    %c0_7 = arith.constant 0 : index
    %2 = vector.load %arg3[%c0_5, %c0_6, %c0_7] : memref<1x64x1xf32, #tpu.memory_space<vmem>>, vector<1x64x1xf32>
    %3 = vector.broadcast %1 : vector<1x64x1xf32> to vector<1x64x2048xf32>
    %4 = arith.mulf %3, %0 : vector<1x64x2048xf32>
    %5 = vector.broadcast %2 : vector<1x64x1xf32> to vector<1x64x2048xf32>
    %6 = arith.addf %4, %5 : vector<1x64x2048xf32>
    %c0_8 = arith.constant 0 : index
    %c0_9 = arith.constant 0 : index
    %c0_10 = arith.constant 0 : index
    %7 = vector.load %arg5[%c0_8, %c0_9, %c0_10] : memref<1x64x2048xf32, #tpu.memory_space<vmem>>, vector<1x64x2048xf32>
    tpu.vector_store %arg5[%c0_8, %c0_9, %c0_10], %6 {strides = array<i32>} : memref<1x64x2048xf32, #tpu.memory_space<vmem>>, vector<1x64x2048xf32>,
    return
  }
  func.func @transform_0(%arg0: i32, %arg1: i32) -> (i32, i32, i32) {
    %c0_i32 = arith.constant 0 : i32
    %c0_i32_0 = arith.constant 0 : i32
    %c0_i32_1 = arith.constant 0 : i32
    return %arg0, %c0_i32, %c0_i32_0 : i32, i32, i32
  }
  func.func @transform_1(%arg0: i32, %arg1: i32) -> (i32, i32, i32) {
    %c0_i32 = arith.constant 0 : i32
    %c0_i32_0 = arith.constant 0 : i32
    %c0_i32_1 = arith.constant 0 : i32
    return %arg0, %c0_i32, %c0_i32_0 : i32, i32, i32
  }
  func.func @transform_2(%arg0: i32, %arg1: i32) -> (i32, i32, i32) {
    %c0_i32 = arith.constant 0 : i32
    %c0_i32_0 = arith.constant 0 : i32
    return %arg0, %c0_i32, %arg1 : i32, i32, i32
  }
  func.func @transform_3(%arg0: i32, %arg1: i32) -> (i32, i32, i32) {
    %c0_i32 = arith.constant 0 : i32
    %c0_i32_0 = arith.constant 0 : i32
    return %arg0, %c0_i32, %arg1 : i32, i32, i32
  }
}

</mosaic_0001>

<llo_original>
// kernel: tpu_custom_call.1
$region0: #{tpu_custom_call.1}
  #allocation0 [shape = 'u32[]', space=smem, size = 0x4, offset = 0x4, fixed_abs, tag = 'smem constant byte address 0x4 - core index']
  #allocation1 [shape = 'u32[144,128]{1,0:T(1,128)}', space=vmem, size = 0x12000, scoped, tag = 'internal scratch']
  %s0 = inlined_call_operand.vmem [shape: f32[2,64,1], index: 0, kind: input, shape index: {}]
  %s1 = inlined_call_operand.vmem [shape: f32[2,64,1], index: 1, kind: input, shape index: {}]
  %s2 = inlined_call_operand.hbm [shape: f32[2,64,2048], index: 2, kind: input, shape index: {}]
  %s3 = inlined_call_operand.hbm [shape: f32[2,64,2048], index: 3, kind: output, shape index: {}]
  %s4 = sld [smem:[#allocation0]]
  $region49: #{tpu_custom_call.1} parent=0
    _
  %s6 = ssub.s32 1, %s4
  %s7 = scalar_select 0, %s6, %s4
  $region1: #{tpu_custom_call.1} parent=0
    #allocation2 [shape = 'u8[1048576]{0}', space=vmem, size = 0x100000, scoped, tag = 'input window, operand 2']
    #allocation3 [shape = 's32[2]{0}', space=sflag, size = 0x8, scoped, tag = 'scoped memory for tpu_custom_call.1']
    #allocation4 [shape = 's32[2]{0}', space=sflag, size = 0x8, scoped, tag = 'scoped memory for tpu_custom_call.1']
    #allocation5 [shape = 'u8[1048576]{0}', space=vmem, size = 0x100000, scoped, tag = 'output window, operand 0']
    %8 = vsyncpa [#allocation3], 0
    %s9 = scalar_lea.sflag [#allocation3], 1
    %10 = vsyncpa %s9, 0
    %11 = vsyncpa [#allocation4], 0
    %s12 = scalar_lea.sflag [#allocation4], 1
    %13 = vsyncpa %s12, 0
    loop: start=0, step=1, limit=4
    $region2: #{tpu_custom_call.1} parent=1 // loop_pre_header
      _
    $region3: #{tpu_custom_call.1} parent=1 // loop_header
      %s15 = sphi 0, %s19
      %p16 = scmp.ge.s32.totalorder %s15, 4
      %s22 = sphi 0, %s34
      %s23 = sphi 0, %s30
      %s24 = sphi 0, %s22
      %s25 = sphi 0, %s23
      %s26 = sphi 0, %s24
      %s27 = sphi 0, %s25
      %s37 = sphi 0, %s39
      %s40 = sphi 0, %s37
      %s41 = sphi 0, %s40
      %s57 = sphi 0, %s41
      %s63 = sphi 0, %s65
      %s66 = sphi 0, %s63
      %s67 = sphi 0, %s66
      %s83 = sphi 0, %s67
      %s91 = sphi 0, %s93
      %s94 = sphi 0, %s91
      %s95 = sphi 0, %s94
      %s111 = sphi 0, %s95
      %s119 = sphi 0, %s121
      %s122 = sphi 0, %s119
      %s123 = sphi 0, %s122
      %s139 = sphi 0, %s123
    $region4: #{tpu_custom_call.1} parent=1 // loop_header_branch
      %18 = sbr.rel (%p16) target = $region8
    $region5: #{tpu_custom_call.1} parent=1 // loop_body
      %s20 = ssub.s32 %s15, 1
      %s21 = ssub.s32 %s15, 2
      %s28 = sadd.s32 1, %s23
      %p29 = scmp.ge.s32.totalorder %s28, 1
      %s30 = scalar_select %p29, 0, %s28
      %s31 = sadd.s32 1, %s22
      %s32 = scalar_select %p29, %s31, %s22
      %p33 = scmp.ge.s32.totalorder %s32, 2
      %s34 = scalar_select %p33, 0, %s32
      %s35 = ssub.s32 %s22, %s34
      %p36 = scmp.eq.s32.totalorder %s35, 0
      %s38 = sadd.s32 %s37, 1
      %s39 = scalar_select %p36, %s37, %s38
      %p42 = pneg %p36
      %p43 = scmp.eq.s32.totalorder %s15, 1
      %p44 = por %p42, %p43
      %p45 = scmp.ne.s32.totalorder %s37, %s40
      %p46 = scmp.eq.s32.totalorder %s15, 0
      %p47 = por %p45, %p46
      %p48 = scmp.ne.s32.totalorder %s37, %s40
      %p49 = scmp.eq.s32.totalorder %s20, 1
      %p50 = por %p48, %p49
      %p51 = scmp.ne.s32.totalorder %s40, %s41
      %p52 = scmp.eq.s32.totalorder %s20, 0
      %p53 = por %p51, %p52
      %p54 = scmp.ne.s32.totalorder %s40, %s41
      %p55 = scmp.eq.s32.totalorder %s21, 1
      %p56 = por %p54, %p55
      %p58 = scmp.ne.s32.totalorder %s41, %s57
      %p59 = scmp.eq.s32.totalorder %s21, 0
      %p60 = por %p58, %p59
      %s61 = ssub.s32 %s22, %s34
      %p62 = scmp.eq.s32.totalorder %s61, 0
      %s64 = sadd.s32 %s63, 1
      %s65 = scalar_select %p62, %s63, %s64
      %p68 = pneg %p62
      %p69 = scmp.eq.s32.totalorder %s15, 1
      %p70 = por %p68, %p69
      %p71 = scmp.ne.s32.totalorder %s63, %s66
      %p72 = scmp.eq.s32.totalorder %s15, 0
      %p73 = por %p71, %p72
      %p74 = scmp.ne.s32.totalorder %s63, %s66
      %p75 = scmp.eq.s32.totalorder %s20, 1
      %p76 = por %p74, %p75
      %p77 = scmp.ne.s32.totalorder %s66, %s67
      %p78 = scmp.eq.s32.totalorder %s20, 0
      %p79 = por %p77, %p78
      %p80 = scmp.ne.s32.totalorder %s66, %s67
      %p81 = scmp.eq.s32.totalorder %s21, 1
      %p82 = por %p80, %p81
      %p84 = scmp.ne.s32.totalorder %s67, %s83
      %p85 = scmp.eq.s32.totalorder %s21, 0
      %p86 = por %p84, %p85
      %s87 = ssub.s32 %s22, %s34
      %s88 = ssub.s32 %s23, %s30
      %s89 = sor.u32 %s87, %s88
      %p90 = scmp.eq.s32.totalorder %s89, 0
      %s92 = sadd.s32 %s91, 1
      %s93 = scalar_select %p90, %s91, %s92
      %p96 = pneg %p90
      %p97 = scmp.eq.s32.totalorder %s15, 1
      %p98 = por %p96, %p97
      %p99 = scmp.ne.s32.totalorder %s91, %s94
      %p100 = scmp.eq.s32.totalorder %s15, 0
      %p101 = por %p99, %p100
      %p102 = scmp.ne.s32.totalorder %s91, %s94
      %p103 = scmp.eq.s32.totalorder %s20, 1
      %p104 = por %p102, %p103
      %p105 = scmp.ne.s32.totalorder %s94, %s95
      %p106 = scmp.eq.s32.totalorder %s20, 0
      %p107 = por %p105, %p106
      %p108 = scmp.ne.s32.totalorder %s94, %s95
      %p109 = scmp.eq.s32.totalorder %s21, 1
      %p110 = por %p108, %p109
      %p112 = scmp.ne.s32.totalorder %s95, %s111
      %p113 = scmp.eq.s32.totalorder %s21, 0
      %p114 = por %p112, %p113
      %s115 = ssub.s32 %s22, %s34
      %s116 = ssub.s32 %s23, %s30
      %s117 = sor.u32 %s115, %s116
      %p118 = scmp.eq.s32.totalorder %s117, 0
      %s120 = sadd.s32 %s119, 1
      %s121 = scalar_select %p118, %s119, %s120
      %p124 = pneg %p118
      %p125 = scmp.eq.s32.totalorder %s15, 1
      %p126 = por %p124, %p125
      %p127 = scmp.ne.s32.totalorder %s119, %s122
      %p128 = scmp.eq.s32.totalorder %s15, 0
      %p129 = por %p127, %p128
      %p130 = scmp.ne.s32.totalorder %s119, %s122
      %p131 = scmp.eq.s32.totalorder %s20, 1
      %p132 = por %p130, %p131
      %p133 = scmp.ne.s32.totalorder %s122, %s123
      %p134 = scmp.eq.s32.totalorder %s20, 0
      %p135 = por %p133, %p134
      %p136 = scmp.ne.s32.totalorder %s122, %s123
      %p137 = scmp.eq.s32.totalorder %s21, 1
      %p138 = por %p136, %p137
      %p140 = scmp.ne.s32.totalorder %s123, %s139
      %p141 = scmp.eq.s32.totalorder %s21, 0
      %p142 = por %p140, %p141
      %p143 = scmp.le.s32.totalorder 1, %s15
      %p144 = scmp.lt.s32.totalorder %s15, 3
      %p145 = pnand %p143, %p144
      %p146 = pneg %p145
      // Predicated region
      $region9: #{tpu_custom_call.1} parent=5 // pred_check
        _
      $region10: #{tpu_custom_call.1} parent=5 // pred_check_branch
        %148 = sbr.rel (%p145) target = $region12
      $region11: #{tpu_custom_call.1} parent=5 // pred_region
        %s149 = ssub.s32 %s15, 1
      $region12: #{tpu_custom_call.1} parent=5 // pred_fallthru
        _
      %p150 = scmp.lt.s32.totalorder %s15, 2
      // Predicated region
      $region13: #{tpu_custom_call.1} parent=5 // pred_check
        %p151 = pneg %p150
      $region14: #{tpu_custom_call.1} parent=5 // pred_check_branch
        %153 = sbr.rel (%p151) target = $region16
      $region15: #{tpu_custom_call.1} parent=5 // pred_region
        // Predicated region
        $region17: #{tpu_custom_call.1} parent=15 // pred_check
          %p154 = pneg %p47
        $region18: #{tpu_custom_call.1} parent=15 // pred_check_branch
          %156 = sbr.rel (%p154) target = $region20
        $region19: #{tpu_custom_call.1} parent=15 // pred_region
          %p157 = scmp.lt.s32.totalorder %s22, 1
          %s158 = scalar_select %p157, %s22, 1
          %s159 = smul.addr %s158, 8
          %s160 = smul.addr %s159, 8
          %s161 = scalar_lea.vmem %s0, %s160
        $region20: #{tpu_custom_call.1} parent=15 // pred_fallthru
          _
        // Predicated region
        $region21: #{tpu_custom_call.1} parent=15 // pred_check
          %p162 = pneg %p73
        $region22: #{tpu_custom_call.1} parent=15 // pred_check_branch
          %164 = sbr.rel (%p162) target = $region24
        $region23: #{tpu_custom_call.1} parent=15 // pred_region
          %p165 = scmp.lt.s32.totalorder %s22, 1
          %s166 = scalar_select %p165, %s22, 1
          %s167 = smul.addr %s166, 8
          %s168 = smul.addr %s167, 8
          %s169 = scalar_lea.vmem %s1, %s168
        $region24: #{tpu_custom_call.1} parent=15 // pred_fallthru
          _
        // Predicated region
        $region25: #{tpu_custom_call.1} parent=15 // pred_check
          %p170 = pneg %p101
        $region26: #{tpu_custom_call.1} parent=15 // pred_check_branch
          %172 = sbr.rel (%p170) target = $region28
        $region27: #{tpu_custom_call.1} parent=15 // pred_region
          %s173 = sand.u32 %s91, 1
          %s174 = scalar_lea.sflag [#allocation3], %s173
          %s175 = sand.u32 %s91, 1
          %s176 = smul.addr %s175, 1024
          %s177 = scalar_lea.vmem [#allocation2], %s176
          %s178 = smul.u32 16, %s23
          %s180 = ssub.s32 16384, 16384
          %181 = vsyncadd %s174, %s180
          %s182 = smul.addr %s22, 128
          %s183 = sadd.s32 %s178, %s182
          %s184 = smul.addr %s183, 128
          %s185 = scalar_lea.hbm %s2, %s184
          %s186 = sshll.u32 %s177, 4
          %s187 = int_to_ptr.vmem [resolvable:$true] %s186
          %192 = dma.hbm_to_vmem [thread:$0]  %s185, 16384, %s187, %s174, 2048, 2048, 128
        $region28: #{tpu_custom_call.1} parent=15 // pred_fallthru
          _
      $region16: #{tpu_custom_call.1} parent=5 // pred_fallthru
        _
      %p193 = scmp.le.s32.totalorder 1, %s15
      %p194 = scmp.lt.s32.totalorder %s15, 3
      %p195 = pnand %p193, %p194
      %p196 = pneg %p195
      // Predicated region
      $region29: #{tpu_custom_call.1} parent=5 // pred_check
        _
      $region30: #{tpu_custom_call.1} parent=5 // pred_check_branch
        %198 = sbr.rel (%p195) target = $region32
      $region31: #{tpu_custom_call.1} parent=5 // pred_region
        %s199 = ssub.s32 %s15, 1
        %s200 = sand.u32 %s94, 1
        %s201 = scalar_lea.sflag [#allocation3], %s200
        %s202 = sand.u32 %s94, 1
        %s203 = smul.addr %s202, 1024
        %s204 = scalar_lea.vmem [#allocation2], %s203
        // Predicated region
        $region33: #{tpu_custom_call.1} parent=31 // pred_check
          %p205 = pneg %p107
        $region34: #{tpu_custom_call.1} parent=31 // pred_check_branch
          %207 = sbr.rel (%p205) target = $region36
        $region35: #{tpu_custom_call.1} parent=31 // pred_region
          %208 = dma.done %s201, 16384
        $region36: #{tpu_custom_call.1} parent=31 // pred_fallthru
          _
        %p209 = scmp.lt.s32.totalorder %s24, 1
        %s210 = scalar_select %p209, %s24, 1
        %s211 = smul.addr %s210, 8
        %s212 = smul.addr %s211, 8
        %s213 = scalar_lea.vmem %s0, %s212
        %p214 = pneg %p53
        %p215 = pneg %p50
        %p216 = scmp.lt.s32.totalorder %s24, 1
        %s217 = scalar_select %p216, %s24, 1
        %s218 = smul.addr %s217, 8
        %s219 = smul.addr %s218, 8
        %s220 = scalar_lea.vmem %s1, %s219
        %p221 = pneg %p79
        %p222 = pneg %p76
        %s223 = sand.u32 %s94, 1
        %s224 = scalar_lea.sflag [#allocation3], %s223
        %s225 = sand.u32 %s94, 1
        %s226 = smul.addr %s225, 1024
        %s227 = scalar_lea.vmem [#allocation2], %s226
        %p228 = pneg %p107
        %p229 = pneg %p104
        %p230 = pneg %p135
        %p231 = pneg %p132
        %s232 = sand.u32 %s122, 1
        %s233 = scalar_lea.sflag [#allocation4], %s232
        %s234 = sand.u32 %s122, 1
        %s235 = smul.addr %s234, 1024
        %s236 = scalar_lea.vmem [#allocation5], %s235
        %p237 = scmp.lt.s32.totalorder %s24, 1
        %s238 = scalar_select %p237, %s24, 1
        %s239 = smul.addr %s238, 8
        %s240 = smul.addr %s239, 8
        %s241 = scalar_lea.vmem %s0, %s240
        %p242 = scmp.lt.s32.totalorder %s24, 1
        %s243 = scalar_select %p242, %s24, 1
        %s244 = smul.addr %s243, 8
        %s245 = smul.addr %s244, 8
        %s246 = scalar_lea.vmem %s1, %s245
        %s247 = smul.u32 16, %s25
        %s248 = smul.u32 16, %s25
        %v249 = vld [vmem:[%s204] sm:$0xff]
        %v250 = vld [vmem:[%s204 + $0x8] sm:$0xff]
        %v251 = vld [vmem:[%s204 + $0x10] sm:$0xff]
        %v252 = vld [vmem:[%s204 + $0x18] sm:$0xff]
        %v253 = vld [vmem:[%s204 + $0x20] sm:$0xff]
        %v254 = vld [vmem:[%s204 + $0x28] sm:$0xff]
        %v255 = vld [vmem:[%s204 + $0x30] sm:$0xff]
        %v256 = vld [vmem:[%s204 + $0x38] sm:$0xff]
        %v257 = vld [vmem:[%s204 + $0x40] sm:$0xff]
        %v258 = vld [vmem:[%s204 + $0x48] sm:$0xff]
        %v259 = vld [vmem:[%s204 + $0x50] sm:$0xff]
        %v260 = vld [vmem:[%s204 + $0x58] sm:$0xff]
        %v261 = vld [vmem:[%s204 + $0x60] sm:$0xff]
        %v262 = vld [vmem:[%s204 + $0x68] sm:$0xff]
        %v263 = vld [vmem:[%s204 + $0x70] sm:$0xff]
        %v264 = vld [vmem:[%s204 + $0x78] sm:$0xff]
        %v265 = vld [vmem:[%s204 + $0x80] sm:$0xff]
        %v266 = vld [vmem:[%s204 + $0x88] sm:$0xff]
        %v267 = vld [vmem:[%s204 + $0x90] sm:$0xff]
        %v268 = vld [vmem:[%s204 + $0x98] sm:$0xff]
        %v269 = vld [vmem:[%s204 + $0xa0] sm:$0xff]
        %v270 = vld [vmem:[%s204 + $0xa8] sm:$0xff]
        %v271 = vld [vmem:[%s204 + $0xb0] sm:$0xff]
        %v272 = vld [vmem:[%s204 + $0xb8] sm:$0xff]
        %v273 = vld [vmem:[%s204 + $0xc0] sm:$0xff]
        %v274 = vld [vmem:[%s204 + $0xc8] sm:$0xff]
        %v275 = vld [vmem:[%s204 + $0xd0] sm:$0xff]
        %v276 = vld [vmem:[%s204 + $0xd8] sm:$0xff]
        %v277 = vld [vmem:[%s204 + $0xe0] sm:$0xff]
        %v278 = vld [vmem:[%s204 + $0xe8] sm:$0xff]
        %v279 = vld [vmem:[%s204 + $0xf0] sm:$0xff]
        %v280 = vld [vmem:[%s204 + $0xf8] sm:$0xff]
        %v281 = vld [vmem:[%s204 + $0x100] sm:$0xff]
        %v282 = vld [vmem:[%s204 + $0x108] sm:$0xff]
        %v283 = vld [vmem:[%s204 + $0x110] sm:$0xff]
        %v284 = vld [vmem:[%s204 + $0x118] sm:$0xff]
        %v285 = vld [vmem:[%s204 + $0x120] sm:$0xff]
        %v286 = vld [vmem:[%s204 + $0x128] sm:$0xff]
        %v287 = vld [vmem:[%s204 + $0x130] sm:$0xff]
        %v288 = vld [vmem:[%s204 + $0x138] sm:$0xff]
        %v289 = vld [vmem:[%s204 + $0x140] sm:$0xff]
        %v290 = vld [vmem:[%s204 + $0x148] sm:$0xff]
        %v291 = vld [vmem:[%s204 + $0x150] sm:$0xff]
        %v292 = vld [vmem:[%s204 + $0x158] sm:$0xff]
        %v293 = vld [vmem:[%s204 + $0x160] sm:$0xff]
        %v294 = vld [vmem:[%s204 + $0x168] sm:$0xff]
        %v295 = vld [vmem:[%s204 + $0x170] sm:$0xff]
        %v296 = vld [vmem:[%s204 + $0x178] sm:$0xff]
        %v297 = vld [vmem:[%s204 + $0x180] sm:$0xff]
        %v298 = vld [vmem:[%s204 + $0x188] sm:$0xff]
        %v299 = vld [vmem:[%s204 + $0x190] sm:$0xff]
        %v300 = vld [vmem:[%s204 + $0x198] sm:$0xff]
        %v301 = vld [vmem:[%s204 + $0x1a0] sm:$0xff]
        %v302 = vld [vmem:[%s204 + $0x1a8] sm:$0xff]
        %v303 = vld [vmem:[%s204 + $0x1b0] sm:$0xff]
        %v304 = vld [vmem:[%s204 + $0x1b8] sm:$0xff]
        %v305 = vld [vmem:[%s204 + $0x1c0] sm:$0xff]
        %v306 = vld [vmem:[%s204 + $0x1c8] sm:$0xff]
        %v307 = vld [vmem:[%s204 + $0x1d0] sm:$0xff]
        %v308 = vld [vmem:[%s204 + $0x1d8] sm:$0xff]
        %v309 = vld [vmem:[%s204 + $0x1e0] sm:$0xff]
        %v310 = vld [vmem:[%s204 + $0x1e8] sm:$0xff]
        %v311 = vld [vmem:[%s204 + $0x1f0] sm:$0xff]
        %v312 = vld [vmem:[%s204 + $0x1f8] sm:$0xff]
        %v313 = vld [vmem:[%s204 + $0x200] sm:$0xff]
        %v314 = vld [vmem:[%s204 + $0x208] sm:$0xff]
        %v315 = vld [vmem:[%s204 + $0x210] sm:$0xff]
        %v316 = vld [vmem:[%s204 + $0x218] sm:$0xff]
        %v317 = vld [vmem:[%s204 + $0x220] sm:$0xff]
        %v318 = vld [vmem:[%s204 + $0x228] sm:$0xff]
        %v319 = vld [vmem:[%s204 + $0x230] sm:$0xff]
        %v320 = vld [vmem:[%s204 + $0x238] sm:$0xff]
        %v321 = vld [vmem:[%s204 + $0x240] sm:$0xff]
        %v322 = vld [vmem:[%s204 + $0x248] sm:$0xff]
        %v323 = vld [vmem:[%s204 + $0x250] sm:$0xff]
        %v324 = vld [vmem:[%s204 + $0x258] sm:$0xff]
        %v325 = vld [vmem:[%s204 + $0x260] sm:$0xff]
        %v326 = vld [vmem:[%s204 + $0x268] sm:$0xff]
        %v327 = vld [vmem:[%s204 + $0x270] sm:$0xff]
        %v328 = vld [vmem:[%s204 + $0x278] sm:$0xff]
        %v329 = vld [vmem:[%s204 + $0x280] sm:$0xff]
        %v330 = vld [vmem:[%s204 + $0x288] sm:$0xff]
        %v331 = vld [vmem:[%s204 + $0x290] sm:$0xff]
        %v332 = vld [vmem:[%s204 + $0x298] sm:$0xff]
        %v333 = vld [vmem:[%s204 + $0x2a0] sm:$0xff]
        %v334 = vld [vmem:[%s204 + $0x2a8] sm:$0xff]
        %v335 = vld [vmem:[%s204 + $0x2b0] sm:$0xff]
        %v336 = vld [vmem:[%s204 + $0x2b8] sm:$0xff]
        %v337 = vld [vmem:[%s204 + $0x2c0] sm:$0xff]
        %v338 = vld [vmem:[%s204 + $0x2c8] sm:$0xff]
        %v339 = vld [vmem:[%s204 + $0x2d0] sm:$0xff]
        %v340 = vld [vmem:[%s204 + $0x2d8] sm:$0xff]
        %v341 = vld [vmem:[%s204 + $0x2e0] sm:$0xff]
        %v342 = vld [vmem:[%s204 + $0x2e8] sm:$0xff]
        %v343 = vld [vmem:[%s204 + $0x2f0] sm:$0xff]
        %v344 = vld [vmem:[%s204 + $0x2f8] sm:$0xff]
        %v345 = vld [vmem:[%s204 + $0x300] sm:$0xff]
        %v346 = vld [vmem:[%s204 + $0x308] sm:$0xff]
        %v347 = vld [vmem:[%s204 + $0x310] sm:$0xff]
        %v348 = vld [vmem:[%s204 + $0x318] sm:$0xff]
        %v349 = vld [vmem:[%s204 + $0x320] sm:$0xff]
        %v350 = vld [vmem:[%s204 + $0x328] sm:$0xff]
        %v351 = vld [vmem:[%s204 + $0x330] sm:$0xff]
        %v352 = vld [vmem:[%s204 + $0x338] sm:$0xff]
        %v353 = vld [vmem:[%s204 + $0x340] sm:$0xff]
        %v354 = vld [vmem:[%s204 + $0x348] sm:$0xff]
        %v355 = vld [vmem:[%s204 + $0x350] sm:$0xff]
        %v356 = vld [vmem:[%s204 + $0x358] sm:$0xff]
        %v357 = vld [vmem:[%s204 + $0x360] sm:$0xff]
        %v358 = vld [vmem:[%s204 + $0x368] sm:$0xff]
        %v359 = vld [vmem:[%s204 + $0x370] sm:$0xff]
        %v360 = vld [vmem:[%s204 + $0x378] sm:$0xff]
        %v361 = vld [vmem:[%s204 + $0x380] sm:$0xff]
        %v362 = vld [vmem:[%s204 + $0x388] sm:$0xff]
        %v363 = vld [vmem:[%s204 + $0x390] sm:$0xff]
        %v364 = vld [vmem:[%s204 + $0x398] sm:$0xff]
        %v365 = vld [vmem:[%s204 + $0x3a0] sm:$0xff]
        %v366 = vld [vmem:[%s204 + $0x3a8] sm:$0xff]
        %v367 = vld [vmem:[%s204 + $0x3b0] sm:$0xff]
        %v368 = vld [vmem:[%s204 + $0x3b8] sm:$0xff]
        %v369 = vld [vmem:[%s204 + $0x3c0] sm:$0xff]
        %v370 = vld [vmem:[%s204 + $0x3c8] sm:$0xff]
        %v371 = vld [vmem:[%s204 + $0x3d0] sm:$0xff]
        %v372 = vld [vmem:[%s204 + $0x3d8] sm:$0xff]
        %v373 = vld [vmem:[%s204 + $0x3e0] sm:$0xff]
        %v374 = vld [vmem:[%s204 + $0x3e8] sm:$0xff]
        %v375 = vld [vmem:[%s204 + $0x3f0] sm:$0xff]
        %v376 = vld [vmem:[%s204 + $0x3f8] sm:$0xff]
        %v377 = vld [vmem:[%s241] sm:$0xff]
        %v378 = vld [vmem:[%s241 + $0x8] sm:$0xff]
        %v379 = vld [vmem:[%s241 + $0x10] sm:$0xff]
        %v380 = vld [vmem:[%s241 + $0x18] sm:$0xff]
        %v381 = vld [vmem:[%s241 + $0x20] sm:$0xff]
        %v382 = vld [vmem:[%s241 + $0x28] sm:$0xff]
        %v383 = vld [vmem:[%s241 + $0x30] sm:$0xff]
        %v384 = vld [vmem:[%s241 + $0x38] sm:$0xff]
        %v385 = vld [vmem:[%s246] sm:$0xff]
        %v386 = vld [vmem:[%s246 + $0x8] sm:$0xff]
        %v387 = vld [vmem:[%s246 + $0x10] sm:$0xff]
        %v388 = vld [vmem:[%s246 + $0x18] sm:$0xff]
        %v389 = vld [vmem:[%s246 + $0x20] sm:$0xff]
        %v390 = vld [vmem:[%s246 + $0x28] sm:$0xff]
        %v391 = vld [vmem:[%s246 + $0x30] sm:$0xff]
        %v392 = vld [vmem:[%s246 + $0x38] sm:$0xff]
        %394 = vset.pattern.permute.xlu0 0
        %395 = vperm.xlu0 %394, %v377
        %v396 = vpop.permute.xlu0 %395
        %399 = vset.pattern.permute.xlu0 0
        %400 = vperm.xlu0 %399, %v378
        %v401 = vpop.permute.xlu0 %400
        %404 = vset.pattern.permute.xlu0 0
        %405 = vperm.xlu0 %404, %v379
        %v406 = vpop.permute.xlu0 %405
        %409 = vset.pattern.permute.xlu0 0
        %410 = vperm.xlu0 %409, %v380
        %v411 = vpop.permute.xlu0 %410
        %414 = vset.pattern.permute.xlu0 0
        %415 = vperm.xlu0 %414, %v381
        %v416 = vpop.permute.xlu0 %415
        %419 = vset.pattern.permute.xlu0 0
        %420 = vperm.xlu0 %419, %v382
        %v421 = vpop.permute.xlu0 %420
        %424 = vset.pattern.permute.xlu0 0
        %425 = vperm.xlu0 %424, %v383
        %v426 = vpop.permute.xlu0 %425
        %429 = vset.pattern.permute.xlu0 0
        %430 = vperm.xlu0 %429, %v384
        %v431 = vpop.permute.xlu0 %430
        %v433 = vmul.f32 %v396, %v249
        %v434 = vmul.f32 %v396, %v250
        %v435 = vmul.f32 %v396, %v251
        %v436 = vmul.f32 %v396, %v252
        %v437 = vmul.f32 %v396, %v253
        %v438 = vmul.f32 %v396, %v254
        %v439 = vmul.f32 %v396, %v255
        %v440 = vmul.f32 %v396, %v256
        %v441 = vmul.f32 %v396, %v257
        %v442 = vmul.f32 %v396, %v258
        %v443 = vmul.f32 %v396, %v259
        %v444 = vmul.f32 %v396, %v260
        %v445 = vmul.f32 %v396, %v261
        %v446 = vmul.f32 %v396, %v262
        %v447 = vmul.f32 %v396, %v263
        %v448 = vmul.f32 %v396, %v264
        %v449 = vmul.f32 %v401, %v265
        %v450 = vmul.f32 %v401, %v266
        %v451 = vmul.f32 %v401, %v267
        %v452 = vmul.f32 %v401, %v268
        %v453 = vmul.f32 %v401, %v269
        %v454 = vmul.f32 %v401, %v270
        %v455 = vmul.f32 %v401, %v271
        %v456 = vmul.f32 %v401, %v272
        %v457 = vmul.f32 %v401, %v273
        %v458 = vmul.f32 %v401, %v274
        %v459 = vmul.f32 %v401, %v275
        %v460 = vmul.f32 %v401, %v276
        %v461 = vmul.f32 %v401, %v277
        %v462 = vmul.f32 %v401, %v278
        %v463 = vmul.f32 %v401, %v279
        %v464 = vmul.f32 %v401, %v280
        %v465 = vmul.f32 %v406, %v281
        %v466 = vmul.f32 %v406, %v282
        %v467 = vmul.f32 %v406, %v283
        %v468 = vmul.f32 %v406, %v284
        %v469 = vmul.f32 %v406, %v285
        %v470 = vmul.f32 %v406, %v286
        %v471 = vmul.f32 %v406, %v287
        %v472 = vmul.f32 %v406, %v288
        %v473 = vmul.f32 %v406, %v289
        %v474 = vmul.f32 %v406, %v290
        %v475 = vmul.f32 %v406, %v291
        %v476 = vmul.f32 %v406, %v292
        %v477 = vmul.f32 %v406, %v293
        %v478 = vmul.f32 %v406, %v294
        %v479 = vmul.f32 %v406, %v295
        %v480 = vmul.f32 %v406, %v296
        %v481 = vmul.f32 %v411, %v297
        %v482 = vmul.f32 %v411, %v298
        %v483 = vmul.f32 %v411, %v299
        %v484 = vmul.f32 %v411, %v300
        %v485 = vmul.f32 %v411, %v301
        %v486 = vmul.f32 %v411, %v302
        %v487 = vmul.f32 %v411, %v303
        %v488 = vmul.f32 %v411, %v304
        %v489 = vmul.f32 %v411, %v305
        %v490 = vmul.f32 %v411, %v306
        %v491 = vmul.f32 %v411, %v307
        %v492 = vmul.f32 %v411, %v308
        %v493 = vmul.f32 %v411, %v309
        %v494 = vmul.f32 %v411, %v310
        %v495 = vmul.f32 %v411, %v311
        %v496 = vmul.f32 %v411, %v312
        %v497 = vmul.f32 %v416, %v313
        %v498 = vmul.f32 %v416, %v314
        %v499 = vmul.f32 %v416, %v315
        %v500 = vmul.f32 %v416, %v316
        %v501 = vmul.f32 %v416, %v317
        %v502 = vmul.f32 %v416, %v318
        %v503 = vmul.f32 %v416, %v319
        %v504 = vmul.f32 %v416, %v320
        %v505 = vmul.f32 %v416, %v321
        %v506 = vmul.f32 %v416, %v322
        %v507 = vmul.f32 %v416, %v323
        %v508 = vmul.f32 %v416, %v324
        %v509 = vmul.f32 %v416, %v325
        %v510 = vmul.f32 %v416, %v326
        %v511 = vmul.f32 %v416, %v327
        %v512 = vmul.f32 %v416, %v328
        %v513 = vmul.f32 %v421, %v329
        %v514 = vmul.f32 %v421, %v330
        %v515 = vmul.f32 %v421, %v331
        %v516 = vmul.f32 %v421, %v332
        %v517 = vmul.f32 %v421, %v333
        %v518 = vmul.f32 %v421, %v334
        %v519 = vmul.f32 %v421, %v335
        %v520 = vmul.f32 %v421, %v336
        %v521 = vmul.f32 %v421, %v337
        %v522 = vmul.f32 %v421, %v338
        %v523 = vmul.f32 %v421, %v339
        %v524 = vmul.f32 %v421, %v340
        %v525 = vmul.f32 %v421, %v341
        %v526 = vmul.f32 %v421, %v342
        %v527 = vmul.f32 %v421, %v343
        %v528 = vmul.f32 %v421, %v344
        %v529 = vmul.f32 %v426, %v345
        %v530 = vmul.f32 %v426, %v346
        %v531 = vmul.f32 %v426, %v347
        %v532 = vmul.f32 %v426, %v348
        %v533 = vmul.f32 %v426, %v349
        %v534 = vmul.f32 %v426, %v350
        %v535 = vmul.f32 %v426, %v351
        %v536 = vmul.f32 %v426, %v352
        %v537 = vmul.f32 %v426, %v353
        %v538 = vmul.f32 %v426, %v354
        %v539 = vmul.f32 %v426, %v355
        %v540 = vmul.f32 %v426, %v356
        %v541 = vmul.f32 %v426, %v357
        %v542 = vmul.f32 %v426, %v358
        %v543 = vmul.f32 %v426, %v359
        %v544 = vmul.f32 %v426, %v360
        %v545 = vmul.f32 %v431, %v361
        %v546 = vmul.f32 %v431, %v362
        %v547 = vmul.f32 %v431, %v363
        %v548 = vmul.f32 %v431, %v364
        %v549 = vmul.f32 %v431, %v365
        %v550 = vmul.f32 %v431, %v366
        %v551 = vmul.f32 %v431, %v367
        %v552 = vmul.f32 %v431, %v368
        %v553 = vmul.f32 %v431, %v369
        %v554 = vmul.f32 %v431, %v370
        %v555 = vmul.f32 %v431, %v371
        %v556 = vmul.f32 %v431, %v372
        %v557 = vmul.f32 %v431, %v373
        %v558 = vmul.f32 %v431, %v374
        %v559 = vmul.f32 %v431, %v375
        %v560 = vmul.f32 %v431, %v376
        %562 = vset.pattern.permute.xlu0 0
        %563 = vperm.xlu0 %562, %v385
        %v564 = vpop.permute.xlu0 %563
        %567 = vset.pattern.permute.xlu0 0
        %568 = vperm.xlu0 %567, %v386
        %v569 = vpop.permute.xlu0 %568
        %572 = vset.pattern.permute.xlu0 0
        %573 = vperm.xlu0 %572, %v387
        %v574 = vpop.permute.xlu0 %573
        %577 = vset.pattern.permute.xlu0 0
        %578 = vperm.xlu0 %577, %v388
        %v579 = vpop.permute.xlu0 %578
        %582 = vset.pattern.permute.xlu0 0
        %583 = vperm.xlu0 %582, %v389
        %v584 = vpop.permute.xlu0 %583
        %587 = vset.pattern.permute.xlu0 0
        %588 = vperm.xlu0 %587, %v390
        %v589 = vpop.permute.xlu0 %588
        %592 = vset.pattern.permute.xlu0 0
        %593 = vperm.xlu0 %592, %v391
        %v594 = vpop.permute.xlu0 %593
        %597 = vset.pattern.permute.xlu0 0
        %598 = vperm.xlu0 %597, %v392
        %v599 = vpop.permute.xlu0 %598
        %v601 = vadd.f32 %v433, %v564
        %v602 = vadd.f32 %v434, %v564
        %v603 = vadd.f32 %v435, %v564
        %v604 = vadd.f32 %v436, %v564
        %v605 = vadd.f32 %v437, %v564
        %v606 = vadd.f32 %v438, %v564
        %v607 = vadd.f32 %v439, %v564
        %v608 = vadd.f32 %v440, %v564
        %v609 = vadd.f32 %v441, %v564
        %v610 = vadd.f32 %v442, %v564
        %v611 = vadd.f32 %v443, %v564
        %v612 = vadd.f32 %v444, %v564
        %v613 = vadd.f32 %v445, %v564
        %v614 = vadd.f32 %v446, %v564
        %v615 = vadd.f32 %v447, %v564
        %v616 = vadd.f32 %v448, %v564
        %v617 = vadd.f32 %v449, %v569
        %v618 = vadd.f32 %v450, %v569
        %v619 = vadd.f32 %v451, %v569
        %v620 = vadd.f32 %v452, %v569
        %v621 = vadd.f32 %v453, %v569
        %v622 = vadd.f32 %v454, %v569
        %v623 = vadd.f32 %v455, %v569
        %v624 = vadd.f32 %v456, %v569
        %v625 = vadd.f32 %v457, %v569
        %v626 = vadd.f32 %v458, %v569
        %v627 = vadd.f32 %v459, %v569
        %v628 = vadd.f32 %v460, %v569
        %v629 = vadd.f32 %v461, %v569
        %v630 = vadd.f32 %v462, %v569
        %v631 = vadd.f32 %v463, %v569
        %v632 = vadd.f32 %v464, %v569
        %v633 = vadd.f32 %v465, %v574
        %v634 = vadd.f32 %v466, %v574
        %v635 = vadd.f32 %v467, %v574
        %v636 = vadd.f32 %v468, %v574
        %v637 = vadd.f32 %v469, %v574
        %v638 = vadd.f32 %v470, %v574
        %v639 = vadd.f32 %v471, %v574
        %v640 = vadd.f32 %v472, %v574
        %v641 = vadd.f32 %v473, %v574
        %v642 = vadd.f32 %v474, %v574
        %v643 = vadd.f32 %v475, %v574
        %v644 = vadd.f32 %v476, %v574
        %v645 = vadd.f32 %v477, %v574
        %v646 = vadd.f32 %v478, %v574
        %v647 = vadd.f32 %v479, %v574
        %v648 = vadd.f32 %v480, %v574
        %v649 = vadd.f32 %v481, %v579
        %v650 = vadd.f32 %v482, %v579
        %v651 = vadd.f32 %v483, %v579
        %v652 = vadd.f32 %v484, %v579
        %v653 = vadd.f32 %v485, %v579
        %v654 = vadd.f32 %v486, %v579
        %v655 = vadd.f32 %v487, %v579
        %v656 = vadd.f32 %v488, %v579
        %v657 = vadd.f32 %v489, %v579
        %v658 = vadd.f32 %v490, %v579
        %v659 = vadd.f32 %v491, %v579
        %v660 = vadd.f32 %v492, %v579
        %v661 = vadd.f32 %v493, %v579
        %v662 = vadd.f32 %v494, %v579
        %v663 = vadd.f32 %v495, %v579
        %v664 = vadd.f32 %v496, %v579
        %v665 = vadd.f32 %v497, %v584
        %v666 = vadd.f32 %v498, %v584
        %v667 = vadd.f32 %v499, %v584
        %v668 = vadd.f32 %v500, %v584
        %v669 = vadd.f32 %v501, %v584
        %v670 = vadd.f32 %v502, %v584
        %v671 = vadd.f32 %v503, %v584
        %v672 = vadd.f32 %v504, %v584
        %v673 = vadd.f32 %v505, %v584
        %v674 = vadd.f32 %v506, %v584
        %v675 = vadd.f32 %v507, %v584
        %v676 = vadd.f32 %v508, %v584
        %v677 = vadd.f32 %v509, %v584
        %v678 = vadd.f32 %v510, %v584
        %v679 = vadd.f32 %v511, %v584
        %v680 = vadd.f32 %v512, %v584
        %v681 = vadd.f32 %v513, %v589
        %v682 = vadd.f32 %v514, %v589
        %v683 = vadd.f32 %v515, %v589
        %v684 = vadd.f32 %v516, %v589
        %v685 = vadd.f32 %v517, %v589
        %v686 = vadd.f32 %v518, %v589
        %v687 = vadd.f32 %v519, %v589
        %v688 = vadd.f32 %v520, %v589
        %v689 = vadd.f32 %v521, %v589
        %v690 = vadd.f32 %v522, %v589
        %v691 = vadd.f32 %v523, %v589
        %v692 = vadd.f32 %v524, %v589
        %v693 = vadd.f32 %v525, %v589
        %v694 = vadd.f32 %v526, %v589
        %v695 = vadd.f32 %v527, %v589
        %v696 = vadd.f32 %v528, %v589
        %v697 = vadd.f32 %v529, %v594
        %v698 = vadd.f32 %v530, %v594
        %v699 = vadd.f32 %v531, %v594
        %v700 = vadd.f32 %v532, %v594
        %v701 = vadd.f32 %v533, %v594
        %v702 = vadd.f32 %v534, %v594
        %v703 = vadd.f32 %v535, %v594
        %v704 = vadd.f32 %v536, %v594
        %v705 = vadd.f32 %v537, %v594
        %v706 = vadd.f32 %v538, %v594
        %v707 = vadd.f32 %v539, %v594
        %v708 = vadd.f32 %v540, %v594
        %v709 = vadd.f32 %v541, %v594
        %v710 = vadd.f32 %v542, %v594
        %v711 = vadd.f32 %v543, %v594
        %v712 = vadd.f32 %v544, %v594
        %v713 = vadd.f32 %v545, %v599
        %v714 = vadd.f32 %v546, %v599
        %v715 = vadd.f32 %v547, %v599
        %v716 = vadd.f32 %v548, %v599
        %v717 = vadd.f32 %v549, %v599
        %v718 = vadd.f32 %v550, %v599
        %v719 = vadd.f32 %v551, %v599
        %v720 = vadd.f32 %v552, %v599
        %v721 = vadd.f32 %v553, %v599
        %v722 = vadd.f32 %v554, %v599
        %v723 = vadd.f32 %v555, %v599
        %v724 = vadd.f32 %v556, %v599
        %v725 = vadd.f32 %v557, %v599
        %v726 = vadd.f32 %v558, %v599
        %v727 = vadd.f32 %v559, %v599
        %v728 = vadd.f32 %v560, %v599
        %729 = vst [vmem:[%s236] sm:$0xff] %v601
        %730 = vst [vmem:[%s236 + $0x8] sm:$0xff] %v602
        %731 = vst [vmem:[%s236 + $0x10] sm:$0xff] %v603
        %732 = vst [vmem:[%s236 + $0x18] sm:$0xff] %v604
        %733 = vst [vmem:[%s236 + $0x20] sm:$0xff] %v605
        %734 = vst [vmem:[%s236 + $0x28] sm:$0xff] %v606
        %735 = vst [vmem:[%s236 + $0x30] sm:$0xff] %v607
        %736 = vst [vmem:[%s236 + $0x38] sm:$0xff] %v608
        %737 = vst [vmem:[%s236 + $0x40] sm:$0xff] %v609
        %738 = vst [vmem:[%s236 + $0x48] sm:$0xff] %v610
        %739 = vst [vmem:[%s236 + $0x50] sm:$0xff] %v611
        %740 = vst [vmem:[%s236 + $0x58] sm:$0xff] %v612
        %741 = vst [vmem:[%s236 + $0x60] sm:$0xff] %v613
        %742 = vst [vmem:[%s236 + $0x68] sm:$0xff] %v614
        %743 = vst [vmem:[%s236 + $0x70] sm:$0xff] %v615
        %744 = vst [vmem:[%s236 + $0x78] sm:$0xff] %v616
        %745 = vst [vmem:[%s236 + $0x80] sm:$0xff] %v617
        %746 = vst [vmem:[%s236 + $0x88] sm:$0xff] %v618
        %747 = vst [vmem:[%s236 + $0x90] sm:$0xff] %v619
        %748 = vst [vmem:[%s236 + $0x98] sm:$0xff] %v620
        %749 = vst [vmem:[%s236 + $0xa0] sm:$0xff] %v621
        %750 = vst [vmem:[%s236 + $0xa8] sm:$0xff] %v622
        %751 = vst [vmem:[%s236 + $0xb0] sm:$0xff] %v623
        %752 = vst [vmem:[%s236 + $0xb8] sm:$0xff] %v624
        %753 = vst [vmem:[%s236 + $0xc0] sm:$0xff] %v625
        %754 = vst [vmem:[%s236 + $0xc8] sm:$0xff] %v626
        %755 = vst [vmem:[%s236 + $0xd0] sm:$0xff] %v627
        %756 = vst [vmem:[%s236 + $0xd8] sm:$0xff] %v628
        %757 = vst [vmem:[%s236 + $0xe0] sm:$0xff] %v629
        %758 = vst [vmem:[%s236 + $0xe8] sm:$0xff] %v630
        %759 = vst [vmem:[%s236 + $0xf0] sm:$0xff] %v631
        %760 = vst [vmem:[%s236 + $0xf8] sm:$0xff] %v632
        %761 = vst [vmem:[%s236 + $0x100] sm:$0xff] %v633
        %762 = vst [vmem:[%s236 + $0x108] sm:$0xff] %v634
        %763 = vst [vmem:[%s236 + $0x110] sm:$0xff] %v635
        %764 = vst [vmem:[%s236 + $0x118] sm:$0xff] %v636
        %765 = vst [vmem:[%s236 + $0x120] sm:$0xff] %v637
        %766 = vst [vmem:[%s236 + $0x128] sm:$0xff] %v638
        %767 = vst [vmem:[%s236 + $0x130] sm:$0xff] %v639
        %768 = vst [vmem:[%s236 + $0x138] sm:$0xff] %v640
        %769 = vst [vmem:[%s236 + $0x140] sm:$0xff] %v641
        %770 = vst [vmem:[%s236 + $0x148] sm:$0xff] %v642
        %771 = vst [vmem:[%s236 + $0x150] sm:$0xff] %v643
        %772 = vst [vmem:[%s236 + $0x158] sm:$0xff] %v644
        %773 = vst [vmem:[%s236 + $0x160] sm:$0xff] %v645
        %774 = vst [vmem:[%s236 + $0x168] sm:$0xff] %v646
        %775 = vst [vmem:[%s236 + $0x170] sm:$0xff] %v647
        %776 = vst [vmem:[%s236 + $0x178] sm:$0xff] %v648
        %777 = vst [vmem:[%s236 + $0x180] sm:$0xff] %v649
        %778 = vst [vmem:[%s236 + $0x188] sm:$0xff] %v650
        %779 = vst [vmem:[%s236 + $0x190] sm:$0xff] %v651
        %780 = vst [vmem:[%s236 + $0x198] sm:$0xff] %v652
        %781 = vst [vmem:[%s236 + $0x1a0] sm:$0xff] %v653
        %782 = vst [vmem:[%s236 + $0x1a8] sm:$0xff] %v654
        %783 = vst [vmem:[%s236 + $0x1b0] sm:$0xff] %v655
        %784 = vst [vmem:[%s236 + $0x1b8] sm:$0xff] %v656
        %785 = vst [vmem:[%s236 + $0x1c0] sm:$0xff] %v657
        %786 = vst [vmem:[%s236 + $0x1c8] sm:$0xff] %v658
        %787 = vst [vmem:[%s236 + $0x1d0] sm:$0xff] %v659
        %788 = vst [vmem:[%s236 + $0x1d8] sm:$0xff] %v660
        %789 = vst [vmem:[%s236 + $0x1e0] sm:$0xff] %v661
        %790 = vst [vmem:[%s236 + $0x1e8] sm:$0xff] %v662
        %791 = vst [vmem:[%s236 + $0x1f0] sm:$0xff] %v663
        %792 = vst [vmem:[%s236 + $0x1f8] sm:$0xff] %v664
        %793 = vst [vmem:[%s236 + $0x200] sm:$0xff] %v665
        %794 = vst [vmem:[%s236 + $0x208] sm:$0xff] %v666
        %795 = vst [vmem:[%s236 + $0x210] sm:$0xff] %v667
        %796 = vst [vmem:[%s236 + $0x218] sm:$0xff] %v668
        %797 = vst [vmem:[%s236 + $0x220] sm:$0xff] %v669
        %798 = vst [vmem:[%s236 + $0x228] sm:$0xff] %v670
        %799 = vst [vmem:[%s236 + $0x230] sm:$0xff] %v671
        %800 = vst [vmem:[%s236 + $0x238] sm:$0xff] %v672
        %801 = vst [vmem:[%s236 + $0x240] sm:$0xff] %v673
        %802 = vst [vmem:[%s236 + $0x248] sm:$0xff] %v674
        %803 = vst [vmem:[%s236 + $0x250] sm:$0xff] %v675
        %804 = vst [vmem:[%s236 + $0x258] sm:$0xff] %v676
        %805 = vst [vmem:[%s236 + $0x260] sm:$0xff] %v677
        %806 = vst [vmem:[%s236 + $0x268] sm:$0xff] %v678
        %807 = vst [vmem:[%s236 + $0x270] sm:$0xff] %v679
        %808 = vst [vmem:[%s236 + $0x278] sm:$0xff] %v680
        %809 = vst [vmem:[%s236 + $0x280] sm:$0xff] %v681
        %810 = vst [vmem:[%s236 + $0x288] sm:$0xff] %v682
        %811 = vst [vmem:[%s236 + $0x290] sm:$0xff] %v683
        %812 = vst [vmem:[%s236 + $0x298] sm:$0xff] %v684
        %813 = vst [vmem:[%s236 + $0x2a0] sm:$0xff] %v685
        %814 = vst [vmem:[%s236 + $0x2a8] sm:$0xff] %v686
        %815 = vst [vmem:[%s236 + $0x2b0] sm:$0xff] %v687
        %816 = vst [vmem:[%s236 + $0x2b8] sm:$0xff] %v688
        %817 = vst [vmem:[%s236 + $0x2c0] sm:$0xff] %v689
        %818 = vst [vmem:[%s236 + $0x2c8] sm:$0xff] %v690
        %819 = vst [vmem:[%s236 + $0x2d0] sm:$0xff] %v691
        %820 = vst [vmem:[%s236 + $0x2d8] sm:$0xff] %v692
        %821 = vst [vmem:[%s236 + $0x2e0] sm:$0xff] %v693
        %822 = vst [vmem:[%s236 + $0x2e8] sm:$0xff] %v694
        %823 = vst [vmem:[%s236 + $0x2f0] sm:$0xff] %v695
        %824 = vst [vmem:[%s236 + $0x2f8] sm:$0xff] %v696
        %825 = vst [vmem:[%s236 + $0x300] sm:$0xff] %v697
        %826 = vst [vmem:[%s236 + $0x308] sm:$0xff] %v698
        %827 = vst [vmem:[%s236 + $0x310] sm:$0xff] %v699
        %828 = vst [vmem:[%s236 + $0x318] sm:$0xff] %v700
        %829 = vst [vmem:[%s236 + $0x320] sm:$0xff] %v701
        %830 = vst [vmem:[%s236 + $0x328] sm:$0xff] %v702
        %831 = vst [vmem:[%s236 + $0x330] sm:$0xff] %v703
        %832 = vst [vmem:[%s236 + $0x338] sm:$0xff] %v704
        %833 = vst [vmem:[%s236 + $0x340] sm:$0xff] %v705
        %834 = vst [vmem:[%s236 + $0x348] sm:$0xff] %v706
        %835 = vst [vmem:[%s236 + $0x350] sm:$0xff] %v707
        %836 = vst [vmem:[%s236 + $0x358] sm:$0xff] %v708
        %837 = vst [vmem:[%s236 + $0x360] sm:$0xff] %v709
        %838 = vst [vmem:[%s236 + $0x368] sm:$0xff] %v710
        %839 = vst [vmem:[%s236 + $0x370] sm:$0xff] %v711
        %840 = vst [vmem:[%s236 + $0x378] sm:$0xff] %v712
        %841 = vst [vmem:[%s236 + $0x380] sm:$0xff] %v713
        %842 = vst [vmem:[%s236 + $0x388] sm:$0xff] %v714
        %843 = vst [vmem:[%s236 + $0x390] sm:$0xff] %v715
        %844 = vst [vmem:[%s236 + $0x398] sm:$0xff] %v716
        %845 = vst [vmem:[%s236 + $0x3a0] sm:$0xff] %v717
        %846 = vst [vmem:[%s236 + $0x3a8] sm:$0xff] %v718
        %847 = vst [vmem:[%s236 + $0x3b0] sm:$0xff] %v719
        %848 = vst [vmem:[%s236 + $0x3b8] sm:$0xff] %v720
        %849 = vst [vmem:[%s236 + $0x3c0] sm:$0xff] %v721
        %850 = vst [vmem:[%s236 + $0x3c8] sm:$0xff] %v722
        %851 = vst [vmem:[%s236 + $0x3d0] sm:$0xff] %v723
        %852 = vst [vmem:[%s236 + $0x3d8] sm:$0xff] %v724
        %853 = vst [vmem:[%s236 + $0x3e0] sm:$0xff] %v725
        %854 = vst [vmem:[%s236 + $0x3e8] sm:$0xff] %v726
        %855 = vst [vmem:[%s236 + $0x3f0] sm:$0xff] %v727
        %856 = vst [vmem:[%s236 + $0x3f8] sm:$0xff] %v728
        %s857 = sand.u32 %s122, 1
        %s858 = scalar_lea.sflag [#allocation4], %s857
        %s859 = sand.u32 %s122, 1
        %s860 = smul.addr %s859, 1024
        %s861 = scalar_lea.vmem [#allocation5], %s860
        // Predicated region
        $region37: #{tpu_custom_call.1} parent=31 // pred_check
          %p862 = pneg %p132
        $region38: #{tpu_custom_call.1} parent=31 // pred_check_branch
          %864 = sbr.rel (%p862) target = $region40
        $region39: #{tpu_custom_call.1} parent=31 // pred_region
          %s865 = smul.u32 16, %s25
          %s867 = ssub.s32 16384, 16384
          %868 = vsyncadd %s858, %s867
          %s869 = smul.addr %s24, 128
          %s870 = sadd.s32 %s865, %s869
          %s871 = smul.addr %s870, 128
          %s872 = scalar_lea.hbm %s3, %s871
          %s873 = sshll.u32 %s861, 4
          %s874 = int_to_ptr.vmem [resolvable:$true] %s873
          %879 = dma.vmem_to_hbm [thread:$0]  %s874, 16384, %s872, %s858, 2048, 2048, 128
        $region40: #{tpu_custom_call.1} parent=31 // pred_fallthru
          _
      $region32: #{tpu_custom_call.1} parent=5 // pred_fallthru
        _
      %p880 = scmp.le.s32.totalorder 2, %s15
      // Predicated region
      $region41: #{tpu_custom_call.1} parent=5 // pred_check
        %p881 = pneg %p880
      $region42: #{tpu_custom_call.1} parent=5 // pred_check_branch
        %883 = sbr.rel (%p881) target = $region44
      $region43: #{tpu_custom_call.1} parent=5 // pred_region
        %s884 = ssub.s32 %s15, 2
        // Predicated region
        $region45: #{tpu_custom_call.1} parent=43 // pred_check
          %p885 = pneg %p138
        $region46: #{tpu_custom_call.1} parent=43 // pred_check_branch
          %887 = sbr.rel (%p885) target = $region48
        $region47: #{tpu_custom_call.1} parent=43 // pred_region
          %s888 = sand.u32 %s123, 1
          %s889 = scalar_lea.sflag [#allocation4], %s888
          %s890 = sand.u32 %s123, 1
          %s891 = smul.addr %s890, 1024
          %s892 = scalar_lea.vmem [#allocation5], %s891
          %893 = dma.done %s889, 16384
        $region48: #{tpu_custom_call.1} parent=43 // pred_fallthru
          _
      $region44: #{tpu_custom_call.1} parent=5 // pred_fallthru
        _
    $region6: #{tpu_custom_call.1} parent=1 // loop_footer
      %s19 = sadd.s32 1, %s15
    $region7: #{tpu_custom_call.1} parent=1 // loop_footer_branch
      %14 = sbr.rel target = $region3
    $region8: #{tpu_custom_call.1} parent=1 // loop_exit
      _
    %894 = vsyncpa [#allocation3], 1
    %s895 = scalar_lea.sflag [#allocation3], 1
    %896 = vsyncpa %s895, 1
    %897 = vsyncpa [#allocation4], 1
    %s898 = scalar_lea.sflag [#allocation4], 1
    %899 = vsyncpa %s898, 1

</llo_original>
